<compile_context>
chip_gen: v6e
topology: v6e:2x2x1
jax: 0.10.0
libtpu: 0.0.40
codegen_flags: <defaults>
</compile_context>

<pallas_src>
import math

import jax
import jax.numpy as jnp
from jax import lax
from jax.experimental import pallas as pl
from jax.experimental.pallas import tpu as pltpu

IMG_SIZE = 28
IN_FEATURES = IMG_SIZE * IMG_SIZE  # 784
NDF = 64

_TB_MAX = 4096                     # bf16 x tile: 4096*784*2B ~ 6.3 MB; x2 buffers ~12.6 MB
_SUBLANE = 16                      # bf16 sublane tile; batch tiles kept a multiple of this
_VMEM_LIMIT = 32 * 1024 * 1024     # explicit scoped-VMEM budget (safe on v5e/v6e/v7x)


def _round_up(n, m):
    return ((n + m - 1) // m) * m


def _cdiv(a, b):
    return -(-a // b)


def _leaky_relu(x, slope=0.2):
    return jnp.where(x > 0, x, slope * x)


def _choose_tiling(B, tb_max):
    """Pick (TB, B_pad, n_tiles): minimal padding; even tile count when split."""
    n = _cdiv(B, tb_max)
    if n == 1 and B >= 1024:
        n = 2                       # give v7x's two TensorCores one tile each
    if n > 1 and (n % 2):
        n += 1                      # even tile count -> balanced 2-TC megacore sharding
    TB = _round_up(_cdiv(B, n), _SUBLANE)
    return TB, TB * n, n


def discriminator_kernel(x_ref, w1_ref, b1_ref, w2_ref, b2_ref, w3_ref, b3_ref,
                         o_ref):
    """One batch tile. x/w1/w2/w3 are bf16 (MXU-native); accumulation in f32."""
    x = x_ref[...]                                                     # [TB, 784] bf16

    # Layer 1: Linear(784 -> 64) + LeakyReLU(0.2)   (Dropout = identity, eval mode)
    h1 = jnp.dot(x, w1_ref[...], preferred_element_type=jnp.float32)   # [TB, 64] f32
    h1 = _leaky_relu(h1 + b1_ref[...])

    # Layer 2: Linear(64 -> 64) + LeakyReLU(0.2)    (Dropout = identity, eval mode)
    h2 = jnp.dot(h1.astype(jnp.bfloat16), w2_ref[...],
                 preferred_element_type=jnp.float32)                   # [TB, 64] f32
    h2 = _leaky_relu(h2 + b2_ref[...])

    # Layer 3: Linear(64 -> 1) + Sigmoid, computed lane-dense:
    #   logits = w3 @ h2^T -> [1, TB]   (NT dot_general, flash-attention style)
    # so the sigmoid touches TB/128 full vregs and the store is an unmasked
    # lane-dense row instead of TB/8 masked [TB,1] partial stores.
    logits = lax.dot_general(
        w3_ref[...], h2.astype(jnp.bfloat16),
        dimension_numbers=(((1,), (1,)), ((), ())),
        preferred_element_type=jnp.float32)                            # [1, TB]
    logits = logits + b3_ref[0]
    o_ref[0] = jax.nn.sigmoid(logits)                                  # block [1, 1, TB]


def discriminator_forward(x, params, tb_max=_TB_MAX):
    """x: [B, 784] float32 -> [B, 1] float32 (eval-mode forward)."""
    w1, b1, w2, b2, w3, b3 = params
    B = x.shape[0]
    TB, B_pad, n_tiles = _choose_tiling(B, tb_max)

    # Cast in the wrapper so the HBM->VMEM DMA itself is bf16 (halves the
    # dominant x stream); biases and accumulation stay f32.
    x_bf = x.astype(jnp.bfloat16)
    if B_pad != B:
        x_bf = jnp.pad(x_bf, ((0, B_pad - B), (0, 0)))
    w1_bf = w1.astype(jnp.bfloat16)
    w2_bf = w2.astype(jnp.bfloat16)
    w3_bf = w3.astype(jnp.bfloat16)

    const_map = lambda i: (0, 0)
    out_slab = pl.pallas_call(
        discriminator_kernel,
        out_shape=jax.ShapeDtypeStruct((n_tiles, 1, TB), jnp.float32),
        grid=(n_tiles,),
        in_specs=[
            pl.BlockSpec((TB, IN_FEATURES), lambda i: (i, 0)),    # x tile (bf16)
            pl.BlockSpec((IN_FEATURES, NDF), const_map),          # w1 (VMEM-resident)
            pl.BlockSpec((1, NDF), const_map),                    # b1 (f32)
            pl.BlockSpec((NDF, NDF), const_map),                  # w2
            pl.BlockSpec((1, NDF), const_map),                    # b2
            pl.BlockSpec((1, NDF), const_map),                    # w3 row vector
            pl.BlockSpec(memory_space=pltpu.MemorySpace.SMEM),    # b3 scalar in SMEM
        ],
        out_specs=pl.BlockSpec((1, 1, TB), lambda i: (i, 0, 0)),  # lane-dense rows
        compiler_params=pltpu.CompilerParams(
            dimension_semantics=("parallel",),
            vmem_limit_bytes=_VMEM_LIMIT),
    )(x_bf, w1_bf, b1, w2_bf, b2, w3_bf, b3)

    out = out_slab.reshape(B_pad, 1)
    return out[:B] if B_pad != B else out


def init_params(key):
    """PyTorch-default Linear init (uniform +-1/sqrt(fan_in)), f32 master copies.
    w1/w2 stored as [in, out]; w3 stored as a [1, 64] row vector; b3 as (1,)."""
    def linear(key, fan_in, fan_out):
        kw, kb = jax.random.split(key)
        bound = 1.0 / math.sqrt(fan_in)
        w = jax.random.uniform(kw, (fan_in, fan_out), jnp.float32, -bound, bound)
        b = jax.random.uniform(kb, (1, fan_out), jnp.float32, -bound, bound)
        return w, b

    k1, k2, k3 = jax.random.split(key, 3)
    w1, b1 = linear(k1, IN_FEATURES, NDF)
    w2, b2 = linear(k2, NDF, NDF)
    w3_col, b3_row = linear(k3, NDF, 1)      # [64, 1], [1, 1]
    w3 = w3_col.T                            # [1, 64]
    b3 = b3_row.reshape(1)                   # scalar bias (SMEM)
    return (w1, b1, w2, b2, w3, b3)


def reference_forward(x, params):
    """Pure-JAX reference mirroring the kernel's bf16-operand / f32-accum math."""
    w1, b1, w2, b2, w3, b3 = params
    xb = x.astype(jnp.bfloat16)
    h1 = _leaky_relu(jnp.dot(xb, w1.astype(jnp.bfloat16),
                             preferred_element_type=jnp.float32) + b1)
    h2 = _leaky_relu(jnp.dot(h1.astype(jnp.bfloat16), w2.astype(jnp.bfloat16),
                             preferred_element_type=jnp.float32) + b2)
    logits = jnp.dot(h2.astype(jnp.bfloat16), w3.astype(jnp.bfloat16).T,
                     preferred_element_type=jnp.float32) + b3
    return jax.nn.sigmoid(logits)


if __name__ == "__main__":
    key = jax.random.PRNGKey(0)
    k_param, k_x = jax.random.split(key)

    params = init_params(k_param)
    B = 100
    x = jax.random.normal(k_x, (B, IN_FEATURES), dtype=jnp.float32)

    ref = reference_forward(x, params)

    # Single-tile path (default tile cap)...
    out_single = jax.block_until_ready(discriminator_forward(x, params))
    # ...and a multi-tile grid with a padded tail (tb_max=32 -> 4 tiles of 32).
    out_tiled = jax.block_until_ready(discriminator_forward(x, params, tb_max=32))

    for out in (out_single, out_tiled):
        assert out.shape == (B, 1)
        assert bool(jnp.all(jnp.isfinite(out)))
        assert jnp.allclose(out, ref, atol=1e-4, rtol=1e-4), "mismatch vs reference"

    print("KERNEL_OK")
</pallas_src>

<mosaic_0001>
module attributes {stable_mosaic.version = 11 : i64} {
  func.func @discriminator_kernel(%arg0: i32, %arg1: memref<112x784xbf16, #tpu.memory_space<vmem>>, %arg2: memref<784x64xbf16, #tpu.memory_space<vmem>>, %arg3: memref<1x64xf32, #tpu.memory_space<vmem>>, %arg4: memref<64x64xbf16, #tpu.memory_space<vmem>>, %arg5: memref<1x64xf32, #tpu.memory_space<vmem>>, %arg6: memref<1x64xbf16, #tpu.memory_space<vmem>>, %arg7: memref<1xf32, #tpu.memory_space<smem>>, %arg8: memref<1x1x112xf32, #tpu.memory_space<vmem>>) attributes {dimension_semantics = [#tpu.dimension_semantics<parallel>], iteration_bounds = array<i64: 1>, scalar_prefetch = 0 : i64, scratch_operands = 0 : i64, tpu.core_type = #tpu.core_type<tc>, window_params = [{transform_indices = @transform_0, window_bounds = array<i64: 112, 784>}, {pipeline_mode = #tpu.pipeline_mode<synchronous>, transform_indices = @transform_1, window_bounds = array<i64: 784, 64>}, {pipeline_mode = #tpu.pipeline_mode<synchronous>, transform_indices = @transform_2, window_bounds = array<i64: 1, 64>}, {pipeline_mode = #tpu.pipeline_mode<synchronous>, transform_indices = @transform_3, window_bounds = array<i64: 64, 64>}, {pipeline_mode = #tpu.pipeline_mode<synchronous>, transform_indices = @transform_4, window_bounds = array<i64: 1, 64>}, {pipeline_mode = #tpu.pipeline_mode<synchronous>, transform_indices = @transform_5, window_bounds = array<i64: 1, 64>}, {transform_indices = @transform_6, window_bounds = array<i64: 1>}, {transform_indices = @transform_7, window_bounds = array<i64: 1, 1, 112>}]} {
    %c0 = arith.constant 0 : index
    %c0_0 = arith.constant 0 : index
    %0 = vector.load %arg1[%c0, %c0_0] : memref<112x784xbf16, #tpu.memory_space<vmem>>, vector<112x784xbf16>
    %c0_1 = arith.constant 0 : index
    %c0_2 = arith.constant 0 : index
    %1 = vector.load %arg2[%c0_1, %c0_2] : memref<784x64xbf16, #tpu.memory_space<vmem>>, vector<784x64xbf16>
    %cst = arith.constant dense<0.000000e+00> : vector<112x64xf32>
    %2 = tpu.matmul %0, %1, %cst {dimension_numbers = #tpu.dot_dimension_numbers<[1], [0], [0], [1], [0, 0, 1, 1], [], []>} : vector<112x784xbf16>, vector<784x64xbf16>, vector<112x64xf32> -> vector<112x64xf32>
    %c0_3 = arith.constant 0 : index
    %c0_4 = arith.constant 0 : index
    %3 = vector.load %arg3[%c0_3, %c0_4] : memref<1x64xf32, #tpu.memory_space<vmem>>, vector<1x64xf32>
    %4 = vector.broadcast %3 : vector<1x64xf32> to vector<112x64xf32>
    %5 = arith.addf %2, %4 : vector<112x64xf32>
    %cst_5 = arith.constant 0.000000e+00 : f32
    %6 = vector.broadcast %cst_5 : f32 to vector<112x64xf32>
    %7 = arith.cmpf ogt, %5, %6 : vector<112x64xf32>
    %cst_6 = arith.constant 2.000000e-01 : f32
    %8 = vector.broadcast %cst_6 : f32 to vector<112x64xf32>
    %9 = arith.mulf %8, %5 : vector<112x64xf32>
    %10 = arith.select %7, %5, %9 : vector<112x64xi1>, vector<112x64xf32>
    %11 = arith.truncf %10 : vector<112x64xf32> to vector<112x64xbf16>
    %c0_7 = arith.constant 0 : index
    %c0_8 = arith.constant 0 : index
    %12 = vector.load %arg4[%c0_7, %c0_8] : memref<64x64xbf16, #tpu.memory_space<vmem>>, vector<64x64xbf16>
    %cst_9 = arith.constant dense<0.000000e+00> : vector<112x64xf32>
    %13 = tpu.matmul %11, %12, %cst_9 {dimension_numbers = #tpu.dot_dimension_numbers<[1], [0], [0], [1], [0, 0, 1, 1], [], []>} : vector<112x64xbf16>, vector<64x64xbf16>, vector<112x64xf32> -> vector<112x64xf32>
    %c0_10 = arith.constant 0 : index
    %c0_11 = arith.constant 0 : index
    %14 = vector.load %arg5[%c0_10, %c0_11] : memref<1x64xf32, #tpu.memory_space<vmem>>, vector<1x64xf32>
    %15 = vector.broadcast %14 : vector<1x64xf32> to vector<112x64xf32>
    %16 = arith.addf %13, %15 : vector<112x64xf32>
    %cst_12 = arith.constant 0.000000e+00 : f32
    %17 = vector.broadcast %cst_12 : f32 to vector<112x64xf32>
    %18 = arith.cmpf ogt, %16, %17 : vector<112x64xf32>
    %cst_13 = arith.constant 2.000000e-01 : f32
    %19 = vector.broadcast %cst_13 : f32 to vector<112x64xf32>
    %20 = arith.mulf %19, %16 : vector<112x64xf32>
    %21 = arith.select %18, %16, %20 : vector<112x64xi1>, vector<112x64xf32>
    %c0_14 = arith.constant 0 : index
    %c0_15 = arith.constant 0 : index
    %22 = vector.load %arg6[%c0_14, %c0_15] : memref<1x64xbf16, #tpu.memory_space<vmem>>, vector<1x64xbf16>
    %23 = arith.truncf %21 : vector<112x64xf32> to vector<112x64xbf16>
    %cst_16 = arith.constant dense<0.000000e+00> : vector<1x112xf32>
    %24 = tpu.matmul %22, %23, %cst_16 {dimension_numbers = #tpu.dot_dimension_numbers<[1], [1], [0], [0], [0, 0, 1, 0], [], []>} : vector<1x64xbf16>, vector<112x64xbf16>, vector<1x112xf32> -> vector<1x112xf32>
    %c0_17 = arith.constant 0 : index
    %25 = memref.load %arg7[%c0_17] : memref<1xf32, #tpu.memory_space<smem>>
    %26 = vector.broadcast %25 : f32 to vector<1x112xf32>
    %27 = arith.addf %24, %26 : vector<1x112xf32>
    %28 = arith.negf %27 : vector<1x112xf32>
    %29 = math.exp %28 : vector<1x112xf32>
    %cst_18 = arith.constant 1.000000e+00 : f32
    %30 = vector.broadcast %cst_18 : f32 to vector<1x112xf32>
    %31 = arith.addf %30, %29 : vector<1x112xf32>
    %32 = arith.divf %30, %31 : vector<1x112xf32>
    %c0_19 = arith.constant 0 : index
    %c0_20 = arith.constant 0 : index
    %c0_21 = arith.constant 0 : index
    %33 = vector.load %arg8[%c0_19, %c0_20, %c0_21] : memref<1x1x112xf32, #tpu.memory_space<vmem>>, vector<1x1x112xf32>
    %34 = vector.shape_cast %33 : vector<1x1x112xf32> to vector<1x112xf32>
    %35 = vector.shape_cast %32 : vector<1x112xf32> to vector<1x1x112xf32>
    tpu.vector_store %arg8[%c0_19, %c0_20, %c0_21], %35 {strides = array<i32>} : memref<1x1x112xf32, #tpu.memory_space<vmem>>, vector<1x1x112xf32>,
    return
  }
  func.func @transform_0(%arg0: i32) -> (i32, i32) {
    %c0_i32 = arith.constant 0 : i32
    %c0_i32_0 = arith.constant 0 : i32
    return %arg0, %c0_i32 : i32, i32
  }
  func.func @transform_1(%arg0: i32) -> (i32, i32) {
    %c0_i32 = arith.constant 0 : i32
    %c0_i32_0 = arith.constant 0 : i32
    %c0_i32_1 = arith.constant 0 : i32
    return %c0_i32, %c0_i32_0 : i32, i32
  }
  func.func @transform_2(%arg0: i32) -> (i32, i32) {
    %c0_i32 = arith.constant 0 : i32
    %c0_i32_0 = arith.constant 0 : i32
    %c0_i32_1 = arith.constant 0 : i32
    return %c0_i32, %c0_i32_0 : i32, i32
  }
  func.func @transform_3(%arg0: i32) -> (i32, i32) {
    %c0_i32 = arith.constant 0 : i32
    %c0_i32_0 = arith.constant 0 : i32
    %c0_i32_1 = arith.constant 0 : i32
    return %c0_i32, %c0_i32_0 : i32, i32
  }
  func.func @transform_4(%arg0: i32) -> (i32, i32) {
    %c0_i32 = arith.constant 0 : i32
    %c0_i32_0 = arith.constant 0 : i32
    %c0_i32_1 = arith.constant 0 : i32
    return %c0_i32, %c0_i32_0 : i32, i32
  }
  func.func @transform_5(%arg0: i32) -> (i32, i32) {
    %c0_i32 = arith.constant 0 : i32
    %c0_i32_0 = arith.constant 0 : i32
    %c0_i32_1 = arith.constant 0 : i32
    return %c0_i32, %c0_i32_0 : i32, i32
  }
  func.func @transform_6(%arg0: i32) -> i32 {
    %c0_i32 = arith.constant 0 : i32
    %c0_i32_0 = arith.constant 0 : i32
    return %c0_i32 : i32
  }
  func.func @transform_7(%arg0: i32) -> (i32, i32, i32) {
    %c0_i32 = arith.constant 0 : i32
    %c0_i32_0 = arith.constant 0 : i32
    %c0_i32_1 = arith.constant 0 : i32
    return %arg0, %c0_i32, %c0_i32_0 : i32, i32, i32
  }
}

</mosaic_0001>

<llo_original>
// kernel: tpu_custom_call.1
$region0: #{tpu_custom_call.1}
  #allocation0 [shape = 'u32[]', space=smem, size = 0x4, offset = 0x4, fixed_abs, tag = 'smem constant byte address 0x4 - core index']
  #allocation1 [shape = 'u32[144,128]{1,0:T(1,128)}', space=vmem, size = 0x12000, scoped, tag = 'internal scratch']
  #allocation2 [shape = 'f32[1]{0:T(128)S(6)}', space=smem, size = 0x200, scoped, tag = 'scoped memory for tpu_custom_call.1']
  %s0 = inlined_call_operand.vmem [shape: bf16[112,784], index: 0, kind: input, shape index: {}]
  %s1 = inlined_call_operand.vmem [shape: bf16[784,64], index: 1, kind: input, shape index: {}]
  %s2 = inlined_call_operand.vmem [shape: f32[1,64], index: 2, kind: input, shape index: {}]
  %s3 = inlined_call_operand.vmem [shape: bf16[64,64], index: 3, kind: input, shape index: {}]
  %s4 = inlined_call_operand.vmem [shape: f32[1,64], index: 4, kind: input, shape index: {}]
  %s5 = inlined_call_operand.vmem [shape: bf16[1,64], index: 5, kind: input, shape index: {}]
  %s6 = inlined_call_operand.<no memory space> [shape: f32[1], index: 6, kind: input, shape index: {}]
  %s7 = inlined_call_operand.hbm [shape: f32[1,1,112], index: 7, kind: output, shape index: {}]
  %s8 = sld [smem:[#allocation0]]
  $region38: #{tpu_custom_call.1} parent=0
    _
  %s10 = ssub.s32 1, %s8
  %s11 = scalar_select 0, %s10, %s8
  %12 = sst [smem:[#allocation2]] %s6
  $region1: #{tpu_custom_call.1} parent=0
    #allocation3 [shape = 'u8[512]{0}', space=vmem, size = 0x400, scoped, tag = 'output window, operand 0, single buffered']
    #allocation4 [shape = 's32[1]{0}', space=sflag, size = 0x4, scoped, tag = 'scoped memory for tpu_custom_call.1']
    %13 = vsyncpa [#allocation4], 0
    // Predicated region
    $region2: #{tpu_custom_call.1} parent=1 // pred_check
      _
    $region3: #{tpu_custom_call.1} parent=1 // pred_check_branch
      %15 = sbr.rel (0) target = $region5
    $region4: #{tpu_custom_call.1} parent=1 // pred_region
      _
    $region5: #{tpu_custom_call.1} parent=1 // pred_fallthru
      _
    // Predicated region
    $region6: #{tpu_custom_call.1} parent=1 // pred_check
      _
    $region7: #{tpu_custom_call.1} parent=1 // pred_check_branch
      %17 = sbr.rel (0) target = $region9
    $region8: #{tpu_custom_call.1} parent=1 // pred_region
      _
    $region9: #{tpu_custom_call.1} parent=1 // pred_fallthru
      _
    // Predicated region
    $region10: #{tpu_custom_call.1} parent=1 // pred_check
      _
    $region11: #{tpu_custom_call.1} parent=1 // pred_check_branch
      %19 = sbr.rel (0) target = $region13
    $region12: #{tpu_custom_call.1} parent=1 // pred_region
      _
    $region13: #{tpu_custom_call.1} parent=1 // pred_fallthru
      _
    // Predicated region
    $region14: #{tpu_custom_call.1} parent=1 // pred_check
      _
    $region15: #{tpu_custom_call.1} parent=1 // pred_check_branch
      %21 = sbr.rel (0) target = $region17
    $region16: #{tpu_custom_call.1} parent=1 // pred_region
      _
    $region17: #{tpu_custom_call.1} parent=1 // pred_fallthru
      _
    // Predicated region
    $region18: #{tpu_custom_call.1} parent=1 // pred_check
      _
    $region19: #{tpu_custom_call.1} parent=1 // pred_check_branch
      %23 = sbr.rel (0) target = $region21
    $region20: #{tpu_custom_call.1} parent=1 // pred_region
      _
    $region21: #{tpu_custom_call.1} parent=1 // pred_fallthru
      _
    // Predicated region
    $region22: #{tpu_custom_call.1} parent=1 // pred_check
      _
    $region23: #{tpu_custom_call.1} parent=1 // pred_check_branch
      %25 = sbr.rel (0) target = $region25
    $region24: #{tpu_custom_call.1} parent=1 // pred_region
      _
    $region25: #{tpu_custom_call.1} parent=1 // pred_fallthru
      _
    // Predicated region
    $region26: #{tpu_custom_call.1} parent=1 // pred_check
      _
    $region27: #{tpu_custom_call.1} parent=1 // pred_check_branch
      %27 = sbr.rel (0) target = $region29
    $region28: #{tpu_custom_call.1} parent=1 // pred_region
      _
    $region29: #{tpu_custom_call.1} parent=1 // pred_fallthru
      _
    %v29 = vld [vmem:[%s0] sm:$0xff]
    %v30 = vld [vmem:[%s0 + $0x8] sm:$0xff]
    %v31 = vld [vmem:[%s0 + $0x10] sm:$0xff]
    %v32 = vld [vmem:[%s0 + $0x18] sm:$0xf]
    %v33 = vld [vmem:[%s0 + $0x1c] sm:$0xff]
    %v34 = vld [vmem:[%s0 + $0x24] sm:$0xff]
    %v35 = vld [vmem:[%s0 + $0x2c] sm:$0xff]
    %v36 = vld [vmem:[%s0 + $0x34] sm:$0xf]
    %v37 = vld [vmem:[%s0 + $0x38] sm:$0xff]
    %v38 = vld [vmem:[%s0 + $0x40] sm:$0xff]
    %v39 = vld [vmem:[%s0 + $0x48] sm:$0xff]
    %v40 = vld [vmem:[%s0 + $0x50] sm:$0xf]
    %v41 = vld [vmem:[%s0 + $0x54] sm:$0xff]
    %v42 = vld [vmem:[%s0 + $0x5c] sm:$0xff]
    %v43 = vld [vmem:[%s0 + $0x64] sm:$0xff]
    %v44 = vld [vmem:[%s0 + $0x6c] sm:$0xf]
    %v45 = vld [vmem:[%s0 + $0x70] sm:$0xff]
    %v46 = vld [vmem:[%s0 + $0x78] sm:$0xff]
    %v47 = vld [vmem:[%s0 + $0x80] sm:$0xff]
    %v48 = vld [vmem:[%s0 + $0x88] sm:$0xf]
    %v49 = vld [vmem:[%s0 + $0x8c] sm:$0xff]
    %v50 = vld [vmem:[%s0 + $0x94] sm:$0xff]
    %v51 = vld [vmem:[%s0 + $0x9c] sm:$0xff]
    %v52 = vld [vmem:[%s0 + $0xa4] sm:$0xf]
    %v53 = vld [vmem:[%s0 + $0xa8] sm:$0xff]
    %v54 = vld [vmem:[%s0 + $0xb0] sm:$0xff]
    %v55 = vld [vmem:[%s0 + $0xb8] sm:$0xff]
    %v56 = vld [vmem:[%s0 + $0xc0] sm:$0xf]
    %v57 = vld [vmem:[%s0 + $0xc4] sm:$0xff]
    %v58 = vld [vmem:[%s0 + $0xcc] sm:$0xff]
    %v59 = vld [vmem:[%s0 + $0xd4] sm:$0xff]
    %v60 = vld [vmem:[%s0 + $0xdc] sm:$0xf]
    %v61 = vld [vmem:[%s0 + $0xe0] sm:$0xff]
    %v62 = vld [vmem:[%s0 + $0xe8] sm:$0xff]
    %v63 = vld [vmem:[%s0 + $0xf0] sm:$0xff]
    %v64 = vld [vmem:[%s0 + $0xf8] sm:$0xf]
    %v65 = vld [vmem:[%s0 + $0xfc] sm:$0xff]
    %v66 = vld [vmem:[%s0 + $0x104] sm:$0xff]
    %v67 = vld [vmem:[%s0 + $0x10c] sm:$0xff]
    %v68 = vld [vmem:[%s0 + $0x114] sm:$0xf]
    %v69 = vld [vmem:[%s0 + $0x118] sm:$0xff]
    %v70 = vld [vmem:[%s0 + $0x120] sm:$0xff]
    %v71 = vld [vmem:[%s0 + $0x128] sm:$0xff]
    %v72 = vld [vmem:[%s0 + $0x130] sm:$0xf]
    %v73 = vld [vmem:[%s0 + $0x134] sm:$0xff]
    %v74 = vld [vmem:[%s0 + $0x13c] sm:$0xff]
    %v75 = vld [vmem:[%s0 + $0x144] sm:$0xff]
    %v76 = vld [vmem:[%s0 + $0x14c] sm:$0xf]
    %v77 = vld [vmem:[%s0 + $0x150] sm:$0xff]
    %v78 = vld [vmem:[%s0 + $0x158] sm:$0xff]
    %v79 = vld [vmem:[%s0 + $0x160] sm:$0xff]
    %v80 = vld [vmem:[%s0 + $0x168] sm:$0xf]
    %v81 = vld [vmem:[%s0 + $0x16c] sm:$0xff]
    %v82 = vld [vmem:[%s0 + $0x174] sm:$0xff]
    %v83 = vld [vmem:[%s0 + $0x17c] sm:$0xff]
    %v84 = vld [vmem:[%s0 + $0x184] sm:$0xf]
    %v85 = vld [vmem:[%s1] sm:$0xf]
    %v86 = vld [vmem:[%s1 + $0x4] sm:$0xf]
    %v87 = vld [vmem:[%s1 + $0x8] sm:$0xf]
    %v88 = vld [vmem:[%s1 + $0xc] sm:$0xf]
    %v89 = vld [vmem:[%s1 + $0x10] sm:$0xf]
    %v90 = vld [vmem:[%s1 + $0x14] sm:$0xf]
    %v91 = vld [vmem:[%s1 + $0x18] sm:$0xf]
    %v92 = vld [vmem:[%s1 + $0x1c] sm:$0xf]
    %v93 = vld [vmem:[%s1 + $0x20] sm:$0xf]
    %v94 = vld [vmem:[%s1 + $0x24] sm:$0xf]
    %v95 = vld [vmem:[%s1 + $0x28] sm:$0xf]
    %v96 = vld [vmem:[%s1 + $0x2c] sm:$0xf]
    %v97 = vld [vmem:[%s1 + $0x30] sm:$0xf]
    %v98 = vld [vmem:[%s1 + $0x34] sm:$0xf]
    %v99 = vld [vmem:[%s1 + $0x38] sm:$0xf]
    %v100 = vld [vmem:[%s1 + $0x3c] sm:$0xf]
    %v101 = vld [vmem:[%s1 + $0x40] sm:$0xf]
    %v102 = vld [vmem:[%s1 + $0x44] sm:$0xf]
    %v103 = vld [vmem:[%s1 + $0x48] sm:$0xf]
    %v104 = vld [vmem:[%s1 + $0x4c] sm:$0xf]
    %v105 = vld [vmem:[%s1 + $0x50] sm:$0xf]
    %v106 = vld [vmem:[%s1 + $0x54] sm:$0xf]
    %v107 = vld [vmem:[%s1 + $0x58] sm:$0xf]
    %v108 = vld [vmem:[%s1 + $0x5c] sm:$0xf]
    %v109 = vld [vmem:[%s1 + $0x60] sm:$0xf]
    %v110 = vld [vmem:[%s1 + $0x64] sm:$0xf]
    %v111 = vld [vmem:[%s1 + $0x68] sm:$0xf]
    %v112 = vld [vmem:[%s1 + $0x6c] sm:$0xf]
    %v113 = vld [vmem:[%s1 + $0x70] sm:$0xf]
    %v114 = vld [vmem:[%s1 + $0x74] sm:$0xf]
    %v115 = vld [vmem:[%s1 + $0x78] sm:$0xf]
    %v116 = vld [vmem:[%s1 + $0x7c] sm:$0xf]
    %v117 = vld [vmem:[%s1 + $0x80] sm:$0xf]
    %v118 = vld [vmem:[%s1 + $0x84] sm:$0xf]
    %v119 = vld [vmem:[%s1 + $0x88] sm:$0xf]
    %v120 = vld [vmem:[%s1 + $0x8c] sm:$0xf]
    %v121 = vld [vmem:[%s1 + $0x90] sm:$0xf]
    %v122 = vld [vmem:[%s1 + $0x94] sm:$0xf]
    %v123 = vld [vmem:[%s1 + $0x98] sm:$0xf]
    %v124 = vld [vmem:[%s1 + $0x9c] sm:$0xf]
    %v125 = vld [vmem:[%s1 + $0xa0] sm:$0xf]
    %v126 = vld [vmem:[%s1 + $0xa4] sm:$0xf]
    %v127 = vld [vmem:[%s1 + $0xa8] sm:$0xf]
    %v128 = vld [vmem:[%s1 + $0xac] sm:$0xf]
    %v129 = vld [vmem:[%s1 + $0xb0] sm:$0xf]
    %v130 = vld [vmem:[%s1 + $0xb4] sm:$0xf]
    %v131 = vld [vmem:[%s1 + $0xb8] sm:$0xf]
    %v132 = vld [vmem:[%s1 + $0xbc] sm:$0xf]
    %v133 = vld [vmem:[%s1 + $0xc0] sm:$0xf]
    %v134 = vld [vmem:[%s1 + $0xc4] sm:$0xf]
    %v135 = vld [vmem:[%s1 + $0xc8] sm:$0xf]
    %v136 = vld [vmem:[%s1 + $0xcc] sm:$0xf]
    %v137 = vld [vmem:[%s1 + $0xd0] sm:$0xf]
    %v138 = vld [vmem:[%s1 + $0xd4] sm:$0xf]
    %v139 = vld [vmem:[%s1 + $0xd8] sm:$0xf]
    %v140 = vld [vmem:[%s1 + $0xdc] sm:$0xf]
    %v141 = vld [vmem:[%s1 + $0xe0] sm:$0xf]
    %v142 = vld [vmem:[%s1 + $0xe4] sm:$0xf]
    %v143 = vld [vmem:[%s1 + $0xe8] sm:$0xf]
    %v144 = vld [vmem:[%s1 + $0xec] sm:$0xf]
    %v145 = vld [vmem:[%s1 + $0xf0] sm:$0xf]
    %v146 = vld [vmem:[%s1 + $0xf4] sm:$0xf]
    %v147 = vld [vmem:[%s1 + $0xf8] sm:$0xf]
    %v148 = vld [vmem:[%s1 + $0xfc] sm:$0xf]
    %v149 = vld [vmem:[%s1 + $0x100] sm:$0xf]
    %v150 = vld [vmem:[%s1 + $0x104] sm:$0xf]
    %v151 = vld [vmem:[%s1 + $0x108] sm:$0xf]
    %v152 = vld [vmem:[%s1 + $0x10c] sm:$0xf]
    %v153 = vld [vmem:[%s1 + $0x110] sm:$0xf]
    %v154 = vld [vmem:[%s1 + $0x114] sm:$0xf]
    %v155 = vld [vmem:[%s1 + $0x118] sm:$0xf]
    %v156 = vld [vmem:[%s1 + $0x11c] sm:$0xf]
    %v157 = vld [vmem:[%s1 + $0x120] sm:$0xf]
    %v158 = vld [vmem:[%s1 + $0x124] sm:$0xf]
    %v159 = vld [vmem:[%s1 + $0x128] sm:$0xf]
    %v160 = vld [vmem:[%s1 + $0x12c] sm:$0xf]
    %v161 = vld [vmem:[%s1 + $0x130] sm:$0xf]
    %v162 = vld [vmem:[%s1 + $0x134] sm:$0xf]
    %v163 = vld [vmem:[%s1 + $0x138] sm:$0xf]
    %v164 = vld [vmem:[%s1 + $0x13c] sm:$0xf]
    %v165 = vld [vmem:[%s1 + $0x140] sm:$0xf]
    %v166 = vld [vmem:[%s1 + $0x144] sm:$0xf]
    %v167 = vld [vmem:[%s1 + $0x148] sm:$0xf]
    %v168 = vld [vmem:[%s1 + $0x14c] sm:$0xf]
    %v169 = vld [vmem:[%s1 + $0x150] sm:$0xf]
    %v170 = vld [vmem:[%s1 + $0x154] sm:$0xf]
    %v171 = vld [vmem:[%s1 + $0x158] sm:$0xf]
    %v172 = vld [vmem:[%s1 + $0x15c] sm:$0xf]
    %v173 = vld [vmem:[%s1 + $0x160] sm:$0xf]
    %v174 = vld [vmem:[%s1 + $0x164] sm:$0xf]
    %v175 = vld [vmem:[%s1 + $0x168] sm:$0xf]
    %v176 = vld [vmem:[%s1 + $0x16c] sm:$0xf]
    %v177 = vld [vmem:[%s1 + $0x170] sm:$0xf]
    %v178 = vld [vmem:[%s1 + $0x174] sm:$0xf]
    %v179 = vld [vmem:[%s1 + $0x178] sm:$0xf]
    %v180 = vld [vmem:[%s1 + $0x17c] sm:$0xf]
    %v181 = vld [vmem:[%s1 + $0x180] sm:$0xf]
    %v182 = vld [vmem:[%s1 + $0x184] sm:$0xf]
    %v183 = vld [vmem:[%s2] sm:$0x1]
    %v185 = vlaneseq
    %v186 = vshrl.u32 %v185, 7
    %v187 = vsub.s32 0, %v186
    %v188 = vrot.slane %v183, %v187
    %v246 = vunpack.c.l.b16 %v29
    %v247 = vunpack.c.h.b16 %v29
    %v248 = vunpack.c.l.b16 %v30
    %v249 = vunpack.c.h.b16 %v30
    %v250 = vunpack.c.l.b16 %v31
    %v251 = vunpack.c.h.b16 %v31
    %v252 = vunpack.c.l.b16 %v32
    %v253 = vunpack.c.l.b16 %v33
    %v254 = vunpack.c.h.b16 %v33
    %v255 = vunpack.c.l.b16 %v34
    %v256 = vunpack.c.h.b16 %v34
    %v257 = vunpack.c.l.b16 %v35
    %v258 = vunpack.c.h.b16 %v35
    %v259 = vunpack.c.l.b16 %v36
    %v260 = vunpack.c.l.b16 %v37
    %v261 = vunpack.c.h.b16 %v37
    %v262 = vunpack.c.l.b16 %v38
    %v263 = vunpack.c.h.b16 %v38
    %v264 = vunpack.c.l.b16 %v39
    %v265 = vunpack.c.h.b16 %v39
    %v266 = vunpack.c.l.b16 %v40
    %v267 = vunpack.c.l.b16 %v41
    %v268 = vunpack.c.h.b16 %v41
    %v269 = vunpack.c.l.b16 %v42
    %v270 = vunpack.c.h.b16 %v42
    %v271 = vunpack.c.l.b16 %v43
    %v272 = vunpack.c.h.b16 %v43
    %v273 = vunpack.c.l.b16 %v44
    %v274 = vunpack.c.l.b16 %v45
    %v275 = vunpack.c.h.b16 %v45
    %v276 = vunpack.c.l.b16 %v46
    %v277 = vunpack.c.h.b16 %v46
    %v278 = vunpack.c.l.b16 %v47
    %v279 = vunpack.c.h.b16 %v47
    %v280 = vunpack.c.l.b16 %v48
    %v281 = vunpack.c.l.b16 %v49
    %v282 = vunpack.c.h.b16 %v49
    %v283 = vunpack.c.l.b16 %v50
    %v284 = vunpack.c.h.b16 %v50
    %v285 = vunpack.c.l.b16 %v51
    %v286 = vunpack.c.h.b16 %v51
    %v287 = vunpack.c.l.b16 %v52
    %v288 = vunpack.c.l.b16 %v53
    %v289 = vunpack.c.h.b16 %v53
    %v290 = vunpack.c.l.b16 %v54
    %v291 = vunpack.c.h.b16 %v54
    %v292 = vunpack.c.l.b16 %v55
    %v293 = vunpack.c.h.b16 %v55
    %v294 = vunpack.c.l.b16 %v56
    %v295 = vunpack.c.l.b16 %v57
    %v296 = vunpack.c.h.b16 %v57
    %v297 = vunpack.c.l.b16 %v58
    %v298 = vunpack.c.h.b16 %v58
    %v299 = vunpack.c.l.b16 %v59
    %v300 = vunpack.c.h.b16 %v59
    %v301 = vunpack.c.l.b16 %v60
    %v302 = vunpack.c.l.b16 %v61
    %v303 = vunpack.c.h.b16 %v61
    %v304 = vunpack.c.l.b16 %v62
    %v305 = vunpack.c.h.b16 %v62
    %v306 = vunpack.c.l.b16 %v63
    %v307 = vunpack.c.h.b16 %v63
    %v308 = vunpack.c.l.b16 %v64
    %v309 = vunpack.c.l.b16 %v65
    %v310 = vunpack.c.h.b16 %v65
    %v311 = vunpack.c.l.b16 %v66
    %v312 = vunpack.c.h.b16 %v66
    %v313 = vunpack.c.l.b16 %v67
    %v314 = vunpack.c.h.b16 %v67
    %v315 = vunpack.c.l.b16 %v68
    %v316 = vunpack.c.l.b16 %v69
    %v317 = vunpack.c.h.b16 %v69
    %v318 = vunpack.c.l.b16 %v70
    %v319 = vunpack.c.h.b16 %v70
    %v320 = vunpack.c.l.b16 %v71
    %v321 = vunpack.c.h.b16 %v71
    %v322 = vunpack.c.l.b16 %v72
    %v323 = vunpack.c.l.b16 %v73
    %v324 = vunpack.c.h.b16 %v73
    %v325 = vunpack.c.l.b16 %v74
    %v326 = vunpack.c.h.b16 %v74
    %v327 = vunpack.c.l.b16 %v75
    %v328 = vunpack.c.h.b16 %v75
    %v329 = vunpack.c.l.b16 %v76
    %v330 = vunpack.c.l.b16 %v77
    %v331 = vunpack.c.h.b16 %v77
    %v332 = vunpack.c.l.b16 %v78
    %v333 = vunpack.c.h.b16 %v78
    %v334 = vunpack.c.l.b16 %v79
    %v335 = vunpack.c.h.b16 %v79
    %v336 = vunpack.c.l.b16 %v80
    %v337 = vunpack.c.l.b16 %v81
    %v338 = vunpack.c.h.b16 %v81
    %v339 = vunpack.c.l.b16 %v82
    %v340 = vunpack.c.h.b16 %v82
    %v341 = vunpack.c.l.b16 %v83
    %v342 = vunpack.c.h.b16 %v83
    %v343 = vunpack.c.l.b16 %v84
    %v344 = vpack.c.b16 %v253, %v246
    %v345 = vpack.c.b16 %v254, %v247
    %v346 = vpack.c.b16 %v255, %v248
    %v347 = vpack.c.b16 %v256, %v249
    %v348 = vpack.c.b16 %v257, %v250
    %v349 = vpack.c.b16 %v258, %v251
    %v350 = vpack.c.b16 %v259, %v252
    %v351 = vpack.c.b16 %v267, %v260
    %v352 = vpack.c.b16 %v268, %v261
    %v353 = vpack.c.b16 %v269, %v262
    %v354 = vpack.c.b16 %v270, %v263
    %v355 = vpack.c.b16 %v271, %v264
    %v356 = vpack.c.b16 %v272, %v265
    %v357 = vpack.c.b16 %v273, %v266
    %v358 = vpack.c.b16 %v281, %v274
    %v359 = vpack.c.b16 %v282, %v275
    %v360 = vpack.c.b16 %v283, %v276
    %v361 = vpack.c.b16 %v284, %v277
    %v362 = vpack.c.b16 %v285, %v278
    %v363 = vpack.c.b16 %v286, %v279
    %v364 = vpack.c.b16 %v287, %v280
    %v365 = vpack.c.b16 %v295, %v288
    %v366 = vpack.c.b16 %v296, %v289
    %v367 = vpack.c.b16 %v297, %v290
    %v368 = vpack.c.b16 %v298, %v291
    %v369 = vpack.c.b16 %v299, %v292
    %v370 = vpack.c.b16 %v300, %v293
    %v371 = vpack.c.b16 %v301, %v294
    %v372 = vpack.c.b16 %v309, %v302
    %v373 = vpack.c.b16 %v310, %v303
    %v374 = vpack.c.b16 %v311, %v304
    %v375 = vpack.c.b16 %v312, %v305
    %v376 = vpack.c.b16 %v313, %v306
    %v377 = vpack.c.b16 %v314, %v307
    %v378 = vpack.c.b16 %v315, %v308
    %v379 = vpack.c.b16 %v323, %v316
    %v380 = vpack.c.b16 %v324, %v317
    %v381 = vpack.c.b16 %v325, %v318
    %v382 = vpack.c.b16 %v326, %v319
    %v383 = vpack.c.b16 %v327, %v320
    %v384 = vpack.c.b16 %v328, %v321
    %v385 = vpack.c.b16 %v329, %v322
    %v386 = vpack.c.b16 %v337, %v330
    %v387 = vpack.c.b16 %v338, %v331
    %v388 = vpack.c.b16 %v339, %v332
    %v389 = vpack.c.b16 %v340, %v333
    %v390 = vpack.c.b16 %v341, %v334
    %v391 = vpack.c.b16 %v342, %v335
    %v392 = vpack.c.b16 %v343, %v336
    %v533 = vunpack.c.l.b16 %v85
    %v534 = vunpack.c.l.b16 %v86
    %v535 = vunpack.c.l.b16 %v87
    %v536 = vunpack.c.l.b16 %v88
    %v537 = vunpack.c.l.b16 %v89
    %v538 = vunpack.c.l.b16 %v90
    %v539 = vunpack.c.l.b16 %v91
    %v540 = vunpack.c.l.b16 %v92
    %v541 = vunpack.c.l.b16 %v93
    %v542 = vunpack.c.l.b16 %v94
    %v543 = vunpack.c.l.b16 %v95
    %v544 = vunpack.c.l.b16 %v96
    %v545 = vunpack.c.l.b16 %v97
    %v546 = vunpack.c.l.b16 %v98
    %v547 = vunpack.c.l.b16 %v99
    %v548 = vunpack.c.l.b16 %v100
    %v549 = vunpack.c.l.b16 %v101
    %v550 = vunpack.c.l.b16 %v102
    %v551 = vunpack.c.l.b16 %v103
    %v552 = vunpack.c.l.b16 %v104
    %v553 = vunpack.c.l.b16 %v105
    %v554 = vunpack.c.l.b16 %v106
    %v555 = vunpack.c.l.b16 %v107
    %v556 = vunpack.c.l.b16 %v108
    %v557 = vunpack.c.l.b16 %v109
    %v558 = vunpack.c.l.b16 %v110
    %v559 = vunpack.c.l.b16 %v111
    %v560 = vunpack.c.l.b16 %v112
    %v561 = vunpack.c.l.b16 %v113
    %v562 = vunpack.c.l.b16 %v114
    %v563 = vunpack.c.l.b16 %v115
    %v564 = vunpack.c.l.b16 %v116
    %v565 = vunpack.c.l.b16 %v117
    %v566 = vunpack.c.l.b16 %v118
    %v567 = vunpack.c.l.b16 %v119
    %v568 = vunpack.c.l.b16 %v120
    %v569 = vunpack.c.l.b16 %v121
    %v570 = vunpack.c.l.b16 %v122
    %v571 = vunpack.c.l.b16 %v123
    %v572 = vunpack.c.l.b16 %v124
    %v573 = vunpack.c.l.b16 %v125
    %v574 = vunpack.c.l.b16 %v126
    %v575 = vunpack.c.l.b16 %v127
    %v576 = vunpack.c.l.b16 %v128
    %v577 = vunpack.c.l.b16 %v129
    %v578 = vunpack.c.l.b16 %v130
    %v579 = vunpack.c.l.b16 %v131
    %v580 = vunpack.c.l.b16 %v132
    %v581 = vunpack.c.l.b16 %v133
    %v582 = vunpack.c.l.b16 %v134
    %v583 = vunpack.c.l.b16 %v135
    %v584 = vunpack.c.l.b16 %v136
    %v585 = vunpack.c.l.b16 %v137
    %v586 = vunpack.c.l.b16 %v138
    %v587 = vunpack.c.l.b16 %v139
    %v588 = vunpack.c.l.b16 %v140
    %v589 = vunpack.c.l.b16 %v141
    %v590 = vunpack.c.l.b16 %v142
    %v591 = vunpack.c.l.b16 %v143
    %v592 = vunpack.c.l.b16 %v144
    %v593 = vunpack.c.l.b16 %v145
    %v594 = vunpack.c.l.b16 %v146
    %v595 = vunpack.c.l.b16 %v147
    %v596 = vunpack.c.l.b16 %v148
    %v597 = vunpack.c.l.b16 %v149
    %v598 = vunpack.c.l.b16 %v150
    %v599 = vunpack.c.l.b16 %v151
    %v600 = vunpack.c.l.b16 %v152
    %v601 = vunpack.c.l.b16 %v153
    %v602 = vunpack.c.l.b16 %v154
    %v603 = vunpack.c.l.b16 %v155
    %v604 = vunpack.c.l.b16 %v156
    %v605 = vunpack.c.l.b16 %v157
    %v606 = vunpack.c.l.b16 %v158
    %v607 = vunpack.c.l.b16 %v159
    %v608 = vunpack.c.l.b16 %v160
    %v609 = vunpack.c.l.b16 %v161
    %v610 = vunpack.c.l.b16 %v162
    %v611 = vunpack.c.l.b16 %v163
    %v612 = vunpack.c.l.b16 %v164
    %v613 = vunpack.c.l.b16 %v165
    %v614 = vunpack.c.l.b16 %v166
    %v615 = vunpack.c.l.b16 %v167
    %v616 = vunpack.c.l.b16 %v168
    %v617 = vunpack.c.l.b16 %v169
    %v618 = vunpack.c.l.b16 %v170
    %v619 = vunpack.c.l.b16 %v171
    %v620 = vunpack.c.l.b16 %v172
    %v621 = vunpack.c.l.b16 %v173
    %v622 = vunpack.c.l.b16 %v174
    %v623 = vunpack.c.l.b16 %v175
    %v624 = vunpack.c.l.b16 %v176
    %v625 = vunpack.c.l.b16 %v177
    %v626 = vunpack.c.l.b16 %v178
    %v627 = vunpack.c.l.b16 %v179
    %v628 = vunpack.c.l.b16 %v180
    %v629 = vunpack.c.l.b16 %v181
    %v630 = vunpack.c.l.b16 %v182
    %v631 = vpack.c.b16 %v534, %v533
    %v632 = vpack.c.b16 %v536, %v535
    %v633 = vpack.c.b16 %v538, %v537
    %v634 = vpack.c.b16 %v540, %v539
    %v635 = vpack.c.b16 %v542, %v541
    %v636 = vpack.c.b16 %v544, %v543
    %v637 = vpack.c.b16 %v546, %v545
    %v638 = vpack.c.b16 %v548, %v547
    %v639 = vpack.c.b16 %v550, %v549
    %v640 = vpack.c.b16 %v552, %v551
    %v641 = vpack.c.b16 %v554, %v553
    %v642 = vpack.c.b16 %v556, %v555
    %v643 = vpack.c.b16 %v558, %v557
    %v644 = vpack.c.b16 %v560, %v559
    %v645 = vpack.c.b16 %v562, %v561
    %v646 = vpack.c.b16 %v564, %v563
    %v647 = vpack.c.b16 %v566, %v565
    %v648 = vpack.c.b16 %v568, %v567
    %v649 = vpack.c.b16 %v570, %v569
    %v650 = vpack.c.b16 %v572, %v571
    %v651 = vpack.c.b16 %v574, %v573
    %v652 = vpack.c.b16 %v576, %v575
    %v653 = vpack.c.b16 %v578, %v577
    %v654 = vpack.c.b16 %v580, %v579
    %v655 = vpack.c.b16 %v582, %v581
    %v656 = vpack.c.b16 %v584, %v583
    %v657 = vpack.c.b16 %v586, %v585
    %v658 = vpack.c.b16 %v588, %v587
    %v659 = vpack.c.b16 %v590, %v589
    %v660 = vpack.c.b16 %v592, %v591
    %v661 = vpack.c.b16 %v594, %v593
    %v662 = vpack.c.b16 %v596, %v595
    %v663 = vpack.c.b16 %v598, %v597
    %v664 = vpack.c.b16 %v600, %v599
    %v665 = vpack.c.b16 %v602, %v601
    %v666 = vpack.c.b16 %v604, %v603
    %v667 = vpack.c.b16 %v606, %v605
    %v668 = vpack.c.b16 %v608, %v607
    %v669 = vpack.c.b16 %v610, %v609
    %v670 = vpack.c.b16 %v612, %v611
    %v671 = vpack.c.b16 %v614, %v613
    %v672 = vpack.c.b16 %v616, %v615
    %v673 = vpack.c.b16 %v618, %v617
    %v674 = vpack.c.b16 %v620, %v619
    %v675 = vpack.c.b16 %v622, %v621
    %v676 = vpack.c.b16 %v624, %v623
    %v677 = vpack.c.b16 %v626, %v625
    %v678 = vpack.c.b16 %v628, %v627
    %v679 = vpack.c.b16 %v630, %v629
    %vm729 = vcmask 130048
    %v731 = vsel %vm729, %v350, 0
    %v734 = vsel %vm729, %v357, 0
    %v737 = vsel %vm729, %v364, 0
    %v740 = vsel %vm729, %v371, 0
    %v743 = vsel %vm729, %v378, 0
    %v746 = vsel %vm729, %v385, 0
    %v749 = vsel %vm729, %v392, 0
    %751 = vmatprep.subr.bf16.mxu0 0
    %752 = vmatpush1.bf16.msra.mxu0 %v638
    %753 = vmatprep.subr.bf16.mxu0 0
    %754 = vmatpush1.bf16.msra.mxu0 %v637
    %755 = vmatprep.subr.bf16.mxu0 0
    %756 = vmatpush1.bf16.msra.mxu0 %v636
    %757 = vmatprep.subr.bf16.mxu0 0
    %758 = vmatpush1.bf16.msra.mxu0 %v635
    %759 = vmatprep.subr.bf16.mxu0 0
    %760 = vmatpush1.bf16.msra.mxu0 %v634
    %761 = vmatprep.subr.bf16.mxu0 0
    %762 = vmatpush1.bf16.msra.mxu0 %v633
    %763 = vmatprep.subr.bf16.mxu0 0
    %764 = vmatpush1.bf16.msra.mxu0 %v632
    %765 = vmatprep.subr.bf16.mxu0 0
    %766 = vmatpush1.bf16.msra.mxu0 %v631
    %767 = vmatprep.subr.bf16.mxu0 0
    %768 = vmatpush2.bf16.msra.mxu0 %v646
    %769 = vmatprep.subr.bf16.mxu0 0
    %770 = vmatpush2.bf16.msra.mxu0 %v645
    %771 = vmatprep.subr.bf16.mxu0 0
    %772 = vmatpush2.bf16.msra.mxu0 %v644
    %773 = vmatprep.subr.bf16.mxu0 0
    %774 = vmatpush2.bf16.msra.mxu0 %v643
    %775 = vmatprep.subr.bf16.mxu0 0
    %776 = vmatpush2.bf16.msra.mxu0 %v642
    %777 = vmatprep.subr.bf16.mxu0 0
    %778 = vmatpush2.bf16.msra.mxu0 %v641
    %779 = vmatprep.subr.bf16.mxu0 0
    %780 = vmatpush2.bf16.msra.mxu0 %v640
    %781 = vmatprep.subr.bf16.mxu0 0
    %782 = vmatpush2.bf16.msra.mxu0 %v639
    %783 = vmatprep.mubr.bf16.mxu0 %v345
    %784 = vmatmul.mubr.bf16.gmra.mxu0 %v344
    %v785 = vpop.f32.mrf.mxu0
    %v786 = vadd.f32 %v188, %v785
    %v787 = vpop.f32.mrf.mxu0
    %v788 = vpop.f32.mrf.mxu0
    %v789 = vadd.f32 %v188, %v788
    %v790 = vpop.f32.mrf.mxu0
    %791 = vmatprep.mubr.bf16.mxu0 %v352
    %792 = vmatmul.mubr.bf16.gmra.mxu0 %v351
    %v793 = vpop.f32.mrf.mxu0
    %v794 = vadd.f32 %v188, %v793
    %v795 = vpop.f32.mrf.mxu0
    %v796 = vpop.f32.mrf.mxu0
    %v797 = vadd.f32 %v188, %v796
    %v798 = vpop.f32.mrf.mxu0
    %799 = vmatprep.mubr.bf16.mxu0 %v359
    %800 = vmatmul.mubr.bf16.gmra.mxu0 %v358
    %v801 = vpop.f32.mrf.mxu0
    %v802 = vadd.f32 %v188, %v801
    %v803 = vpop.f32.mrf.mxu0
    %v804 = vpop.f32.mrf.mxu0
    %v805 = vadd.f32 %v188, %v804
    %v806 = vpop.f32.mrf.mxu0
    %807 = vmatprep.mubr.bf16.mxu0 %v366
    %808 = vmatmul.mubr.bf16.gmra.mxu0 %v365
    %v809 = vpop.f32.mrf.mxu0
    %v810 = vadd.f32 %v188, %v809
    %v811 = vpop.f32.mrf.mxu0
    %v812 = vpop.f32.mrf.mxu0
    %v813 = vadd.f32 %v188, %v812
    %v814 = vpop.f32.mrf.mxu0
    %815 = vmatprep.mubr.bf16.mxu0 %v373
    %816 = vmatmul.mubr.bf16.gmra.mxu0 %v372
    %v817 = vpop.f32.mrf.mxu0
    %v818 = vadd.f32 %v188, %v817
    %v819 = vpop.f32.mrf.mxu0
    %v820 = vpop.f32.mrf.mxu0
    %v821 = vadd.f32 %v188, %v820
    %v822 = vpop.f32.mrf.mxu0
    %823 = vmatprep.mubr.bf16.mxu0 %v380
    %824 = vmatmul.mubr.bf16.gmra.mxu0 %v379
    %v825 = vpop.f32.mrf.mxu0
    %v826 = vadd.f32 %v188, %v825
    %v827 = vpop.f32.mrf.mxu0
    %v828 = vpop.f32.mrf.mxu0
    %v829 = vadd.f32 %v188, %v828
    %v830 = vpop.f32.mrf.mxu0
    %831 = vmatprep.mubr.bf16.mxu0 %v387
    %832 = vmatmul.mubr.bf16.gmra.mxu0 %v386
    %v833 = vpop.f32.mrf.mxu0
    %v834 = vadd.f32 %v188, %v833
    %v835 = vpop.f32.mrf.mxu0
    %v836 = vpop.f32.mrf.mxu0
    %v837 = vadd.f32 %v188, %v836
    %v838 = vpop.f32.mrf.mxu0
    %839 = vdwg.mxu0
    %840 = vmatprep.subr.bf16.mxu0 0
    %841 = vmatpush1.bf16.msra.mxu0 %v654
    %842 = vmatprep.subr.bf16.mxu0 0
    %843 = vmatpush1.bf16.msra.mxu0 %v653
    %844 = vmatprep.subr.bf16.mxu0 0
    %845 = vmatpush1.bf16.msra.mxu0 %v652
    %846 = vmatprep.subr.bf16.mxu0 0
    %847 = vmatpush1.bf16.msra.mxu0 %v651
    %848 = vmatprep.subr.bf16.mxu0 0
    %849 = vmatpush1.bf16.msra.mxu0 %v650
    %850 = vmatprep.subr.bf16.mxu0 0
    %851 = vmatpush1.bf16.msra.mxu0 %v649
    %852 = vmatprep.subr.bf16.mxu0 0
    %853 = vmatpush1.bf16.msra.mxu0 %v648
    %854 = vmatprep.subr.bf16.mxu0 0
    %855 = vmatpush1.bf16.msra.mxu0 %v647
    %856 = vmatprep.subr.bf16.mxu0 0
    %857 = vmatpush2.bf16.msra.mxu0 %v662
    %858 = vmatprep.subr.bf16.mxu0 0
    %859 = vmatpush2.bf16.msra.mxu0 %v661
    %860 = vmatprep.subr.bf16.mxu0 0
    %861 = vmatpush2.bf16.msra.mxu0 %v660
    %862 = vmatprep.subr.bf16.mxu0 0
    %863 = vmatpush2.bf16.msra.mxu0 %v659
    %864 = vmatprep.subr.bf16.mxu0 0
    %865 = vmatpush2.bf16.msra.mxu0 %v658
    %866 = vmatprep.subr.bf16.mxu0 0
    %867 = vmatpush2.bf16.msra.mxu0 %v657
    %868 = vmatprep.subr.bf16.mxu0 0
    %869 = vmatpush2.bf16.msra.mxu0 %v656
    %870 = vmatprep.subr.bf16.mxu0 0
    %871 = vmatpush2.bf16.msra.mxu0 %v655
    %872 = vmatprep.mubr.bf16.mxu0 %v347
    %873 = vmatmul.mubr.bf16.gmra.mxu0 %v346
    %v874 = vpop.f32.mrf.mxu0
    %v875 = vadd.f32 %v786, %v874
    %v876 = vpop.f32.mrf.mxu0
    %v877 = vpop.f32.mrf.mxu0
    %v878 = vadd.f32 %v789, %v877
    %v879 = vpop.f32.mrf.mxu0
    %880 = vmatprep.mubr.bf16.mxu0 %v354
    %881 = vmatmul.mubr.bf16.gmra.mxu0 %v353
    %v882 = vpop.f32.mrf.mxu0
    %v883 = vadd.f32 %v794, %v882
    %v884 = vpop.f32.mrf.mxu0
    %v885 = vpop.f32.mrf.mxu0
    %v886 = vadd.f32 %v797, %v885
    %v887 = vpop.f32.mrf.mxu0
    %888 = vmatprep.mubr.bf16.mxu0 %v361
    %889 = vmatmul.mubr.bf16.gmra.mxu0 %v360
    %v890 = vpop.f32.mrf.mxu0
    %v891 = vadd.f32 %v802, %v890
    %v892 = vpop.f32.mrf.mxu0
    %v893 = vpop.f32.mrf.mxu0
    %v894 = vadd.f32 %v805, %v893
    %v895 = vpop.f32.mrf.mxu0
    %896 = vmatprep.mubr.bf16.mxu0 %v368
    %897 = vmatmul.mubr.bf16.gmra.mxu0 %v367
    %v898 = vpop.f32.mrf.mxu0
    %v899 = vadd.f32 %v810, %v898
    %v900 = vpop.f32.mrf.mxu0
    %v901 = vpop.f32.mrf.mxu0
    %v902 = vadd.f32 %v813, %v901
    %v903 = vpop.f32.mrf.mxu0
    %904 = vmatprep.mubr.bf16.mxu0 %v375
    %905 = vmatmul.mubr.bf16.gmra.mxu0 %v374
    %v906 = vpop.f32.mrf.mxu0
    %v907 = vadd.f32 %v818, %v906
    %v908 = vpop.f32.mrf.mxu0
    %v909 = vpop.f32.mrf.mxu0
    %v910 = vadd.f32 %v821, %v909
    %v911 = vpop.f32.mrf.mxu0
    %912 = vmatprep.mubr.bf16.mxu0 %v382
    %913 = vmatmul.mubr.bf16.gmra.mxu0 %v381
    %v914 = vpop.f32.mrf.mxu0
    %v915 = vadd.f32 %v826, %v914
    %v916 = vpop.f32.mrf.mxu0
    %v917 = vpop.f32.mrf.mxu0
    %v918 = vadd.f32 %v829, %v917
    %v919 = vpop.f32.mrf.mxu0
    %920 = vmatprep.mubr.bf16.mxu0 %v389
    %921 = vmatmul.mubr.bf16.gmra.mxu0 %v388
    %v922 = vpop.f32.mrf.mxu0
    %v923 = vadd.f32 %v834, %v922
    %v924 = vpop.f32.mrf.mxu0
    %v925 = vpop.f32.mrf.mxu0
    %v926 = vadd.f32 %v837, %v925
    %v927 = vpop.f32.mrf.mxu0
    %928 = vdwg.mxu0
    %929 = vmatprep.subr.bf16.mxu0 0
    %930 = vmatpush1.bf16.msra.mxu0 %v670
    %931 = vmatprep.subr.bf16.mxu0 0
    %932 = vmatpush1.bf16.msra.mxu0 %v669
    %933 = vmatprep.subr.bf16.mxu0 0
    %934 = vmatpush1.bf16.msra.mxu0 %v668
    %935 = vmatprep.subr.bf16.mxu0 0
    %936 = vmatpush1.bf16.msra.mxu0 %v667
    %937 = vmatprep.subr.bf16.mxu0 0
    %938 = vmatpush1.bf16.msra.mxu0 %v666
    %939 = vmatprep.subr.bf16.mxu0 0
    %940 = vmatpush1.bf16.msra.mxu0 %v665
    %941 = vmatprep.subr.bf16.mxu0 0
    %942 = vmatpush1.bf16.msra.mxu0 %v664
    %943 = vmatprep.subr.bf16.mxu0 0
    %944 = vmatpush1.bf16.msra.mxu0 %v663
    %945 = vmatprep.subr.bf16.mxu0 0
    %946 = vmatpush2.bf16.msra.mxu0 %v678
    %947 = vmatprep.subr.bf16.mxu0 0
    %948 = vmatpush2.bf16.msra.mxu0 %v677
    %949 = vmatprep.subr.bf16.mxu0 0
    %950 = vmatpush2.bf16.msra.mxu0 %v676
    %951 = vmatprep.subr.bf16.mxu0 0
    %952 = vmatpush2.bf16.msra.mxu0 %v675
    %953 = vmatprep.subr.bf16.mxu0 0
    %954 = vmatpush2.bf16.msra.mxu0 %v674
    %955 = vmatprep.subr.bf16.mxu0 0
    %956 = vmatpush2.bf16.msra.mxu0 %v673
    %957 = vmatprep.subr.bf16.mxu0 0
    %958 = vmatpush2.bf16.msra.mxu0 %v672
    %959 = vmatprep.subr.bf16.mxu0 0
    %960 = vmatpush2.bf16.msra.mxu0 %v671
    %961 = vmatprep.mubr.bf16.mxu0 %v349
    %962 = vmatmul.mubr.bf16.gmra.mxu0 %v348
    %v963 = vpop.f32.mrf.mxu0
    %v964 = vadd.f32 %v875, %v963
    %v965 = vpop.f32.mrf.mxu0
    %v966 = vpop.f32.mrf.mxu0
    %v967 = vadd.f32 %v878, %v966
    %v968 = vpop.f32.mrf.mxu0
    %969 = vmatprep.mubr.bf16.mxu0 %v356
    %970 = vmatmul.mubr.bf16.gmra.mxu0 %v355
    %v971 = vpop.f32.mrf.mxu0
    %v972 = vadd.f32 %v883, %v971
    %v973 = vpop.f32.mrf.mxu0
    %v974 = vpop.f32.mrf.mxu0
    %v975 = vadd.f32 %v886, %v974
    %v976 = vpop.f32.mrf.mxu0
    %977 = vmatprep.mubr.bf16.mxu0 %v363
    %978 = vmatmul.mubr.bf16.gmra.mxu0 %v362
    %v979 = vpop.f32.mrf.mxu0
    %v980 = vadd.f32 %v891, %v979
    %v981 = vpop.f32.mrf.mxu0
    %v982 = vpop.f32.mrf.mxu0
    %v983 = vadd.f32 %v894, %v982
    %v984 = vpop.f32.mrf.mxu0
    %985 = vmatprep.mubr.bf16.mxu0 %v370
    %986 = vmatmul.mubr.bf16.gmra.mxu0 %v369
    %v987 = vpop.f32.mrf.mxu0
    %v988 = vadd.f32 %v899, %v987
    %v989 = vpop.f32.mrf.mxu0
    %v990 = vpop.f32.mrf.mxu0
    %v991 = vadd.f32 %v902, %v990
    %v992 = vpop.f32.mrf.mxu0
    %993 = vmatprep.mubr.bf16.mxu0 %v377
    %994 = vmatmul.mubr.bf16.gmra.mxu0 %v376
    %v995 = vpop.f32.mrf.mxu0
    %v996 = vadd.f32 %v907, %v995
    %v997 = vpop.f32.mrf.mxu0
    %v998 = vpop.f32.mrf.mxu0
    %v999 = vadd.f32 %v910, %v998
    %v1000 = vpop.f32.mrf.mxu0
    %1001 = vmatprep.mubr.bf16.mxu0 %v384
    %1002 = vmatmul.mubr.bf16.gmra.mxu0 %v383
    %v1003 = vpop.f32.mrf.mxu0
    %v1004 = vadd.f32 %v915, %v1003
    %v1005 = vpop.f32.mrf.mxu0
    %v1006 = vpop.f32.mrf.mxu0
    %v1007 = vadd.f32 %v918, %v1006
    %v1008 = vpop.f32.mrf.mxu0
    %1009 = vmatprep.mubr.bf16.mxu0 %v391
    %1010 = vmatmul.mubr.bf16.gmra.mxu0 %v390
    %v1011 = vpop.f32.mrf.mxu0
    %v1012 = vadd.f32 %v923, %v1011
    %v1013 = vpop.f32.mrf.mxu0
    %v1014 = vpop.f32.mrf.mxu0
    %v1015 = vadd.f32 %v926, %v1014
    %v1016 = vpop.f32.mrf.mxu0
    %1017 = vdwg.mxu0
    %1018 = vmatprep.subr.bf16.mxu0 0
    %1019 = vmatpush1.bf16.msra.mxu0 0
    %1020 = vmatprep.subr.bf16.mxu0 0
    %1021 = vmatpush1.bf16.msra.mxu0 0
    %1022 = vmatprep.subr.bf16.mxu0 0
    %1023 = vmatpush1.bf16.msra.mxu0 0
    %1024 = vmatprep.subr.bf16.mxu0 0
    %1025 = vmatpush1.bf16.msra.mxu0 0
    %1026 = vmatprep.subr.bf16.mxu0 0
    %1027 = vmatpush1.bf16.msra.mxu0 0
    %1028 = vmatprep.subr.bf16.mxu0 0
    %1029 = vmatpush1.bf16.msra.mxu0 0
    %1030 = vmatprep.subr.bf16.mxu0 0
    %1031 = vmatpush1.bf16.msra.mxu0 0
    %1032 = vmatprep.subr.bf16.mxu0 0
    %1033 = vmatpush1.bf16.msra.mxu0 %v679
    %1034 = vmatprep.subr.bf16.mxu0 0
    %1035 = vmatpush2.bf16.msra.mxu0 0
    %1036 = vmatprep.subr.bf16.mxu0 0
    %1037 = vmatpush2.bf16.msra.mxu0 0
    %1038 = vmatprep.subr.bf16.mxu0 0
    %1039 = vmatpush2.bf16.msra.mxu0 0
    %1040 = vmatprep.subr.bf16.mxu0 0
    %1041 = vmatpush2.bf16.msra.mxu0 0
    %1042 = vmatprep.subr.bf16.mxu0 0
    %1043 = vmatpush2.bf16.msra.mxu0 0
    %1044 = vmatprep.subr.bf16.mxu0 0
    %1045 = vmatpush2.bf16.msra.mxu0 0
    %1046 = vmatprep.subr.bf16.mxu0 0
    %1047 = vmatpush2.bf16.msra.mxu0 0
    %1048 = vmatprep.subr.bf16.mxu0 0
    %1049 = vmatpush2.bf16.msra.mxu0 0
    %1050 = vmatprep.mubr.bf16.mxu0 0
    %1051 = vmatmul.mubr.bf16.gmra.mxu0 %v731
    %v1052 = vpop.f32.mrf.mxu0
    %v1053 = vadd.f32 %v964, %v1052
    %v1054 = vpop.f32.mrf.mxu0
    %v1055 = vpop.f32.mrf.mxu0
    %v1056 = vadd.f32 %v967, %v1055
    %v1057 = vpop.f32.mrf.mxu0
    %1058 = vmatprep.mubr.bf16.mxu0 0
    %1059 = vmatmul.mubr.bf16.gmra.mxu0 %v734
    %v1060 = vpop.f32.mrf.mxu0
    %v1061 = vadd.f32 %v972, %v1060
    %v1062 = vpop.f32.mrf.mxu0
    %v1063 = vpop.f32.mrf.mxu0
    %v1064 = vadd.f32 %v975, %v1063
    %v1065 = vpop.f32.mrf.mxu0
    %1066 = vmatprep.mubr.bf16.mxu0 0
    %1067 = vmatmul.mubr.bf16.gmra.mxu0 %v737
    %v1068 = vpop.f32.mrf.mxu0
    %v1069 = vadd.f32 %v980, %v1068
    %v1070 = vpop.f32.mrf.mxu0
    %v1071 = vpop.f32.mrf.mxu0
    %v1072 = vadd.f32 %v983, %v1071
    %v1073 = vpop.f32.mrf.mxu0
    %1074 = vmatprep.mubr.bf16.mxu0 0
    %1075 = vmatmul.mubr.bf16.gmra.mxu0 %v740
    %v1076 = vpop.f32.mrf.mxu0
    %v1077 = vadd.f32 %v988, %v1076
    %v1078 = vpop.f32.mrf.mxu0
    %v1079 = vpop.f32.mrf.mxu0
    %v1080 = vadd.f32 %v991, %v1079
    %v1081 = vpop.f32.mrf.mxu0
    %1082 = vmatprep.mubr.bf16.mxu0 0
    %1083 = vmatmul.mubr.bf16.gmra.mxu0 %v743
    %v1084 = vpop.f32.mrf.mxu0
    %v1085 = vadd.f32 %v996, %v1084
    %v1086 = vpop.f32.mrf.mxu0
    %v1087 = vpop.f32.mrf.mxu0
    %v1088 = vadd.f32 %v999, %v1087
    %v1089 = vpop.f32.mrf.mxu0
    %1090 = vmatprep.mubr.bf16.mxu0 0
    %1091 = vmatmul.mubr.bf16.gmra.mxu0 %v746
    %v1092 = vpop.f32.mrf.mxu0
    %v1093 = vadd.f32 %v1004, %v1092
    %v1094 = vpop.f32.mrf.mxu0
    %v1095 = vpop.f32.mrf.mxu0
    %v1096 = vadd.f32 %v1007, %v1095
    %v1097 = vpop.f32.mrf.mxu0
    %1098 = vmatprep.mubr.bf16.mxu0 0
    %1099 = vmatmul.mubr.bf16.gmra.mxu0 %v749
    %v1100 = vpop.f32.mrf.mxu0
    %v1101 = vadd.f32 %v1012, %v1100
    %v1102 = vpop.f32.mrf.mxu0
    %v1103 = vpop.f32.mrf.mxu0
    %v1104 = vadd.f32 %v1015, %v1103
    %v1105 = vpop.f32.mrf.mxu0
    %1106 = vdwg.mxu0
    %vm1107 = vcmp.gt.f32.partialorder %v1053, 0.0
    %vm1108 = vcmp.gt.f32.partialorder %v1056, 0.0
    %vm1109 = vcmp.gt.f32.partialorder %v1061, 0.0
    %vm1110 = vcmp.gt.f32.partialorder %v1064, 0.0
    %vm1111 = vcmp.gt.f32.partialorder %v1069, 0.0
    %vm1112 = vcmp.gt.f32.partialorder %v1072, 0.0
    %vm1113 = vcmp.gt.f32.partialorder %v1077, 0.0
    %vm1114 = vcmp.gt.f32.partialorder %v1080, 0.0
    %vm1115 = vcmp.gt.f32.partialorder %v1085, 0.0
    %vm1116 = vcmp.gt.f32.partialorder %v1088, 0.0
    %vm1117 = vcmp.gt.f32.partialorder %v1093, 0.0
    %vm1118 = vcmp.gt.f32.partialorder %v1096, 0.0
    %vm1119 = vcmp.gt.f32.partialorder %v1101, 0.0
    %vm1120 = vcmp.gt.f32.partialorder %v1104, 0.0
    %v1121 = vmul.f32 %v1053, 0.2
    %v1122 = vmul.f32 %v1056, 0.2
    %v1123 = vmul.f32 %v1061, 0.2
    %v1124 = vmul.f32 %v1064, 0.2
    %v1125 = vmul.f32 %v1069, 0.2
    %v1126 = vmul.f32 %v1072, 0.2
    %v1127 = vmul.f32 %v1077, 0.2
    %v1128 = vmul.f32 %v1080, 0.2
    %v1129 = vmul.f32 %v1085, 0.2
    %v1130 = vmul.f32 %v1088, 0.2
    %v1131 = vmul.f32 %v1093, 0.2
    %v1132 = vmul.f32 %v1096, 0.2
    %v1133 = vmul.f32 %v1101, 0.2
    %v1134 = vmul.f32 %v1104, 0.2
    %v1135 = vsel %vm1107, %v1053, %v1121
    %v1136 = vsel %vm1108, %v1056, %v1122
    %v1137 = vsel %vm1109, %v1061, %v1123
    %v1138 = vsel %vm1110, %v1064, %v1124
    %v1139 = vsel %vm1111, %v1069, %v1125
    %v1140 = vsel %vm1112, %v1072, %v1126
    %v1141 = vsel %vm1113, %v1077, %v1127
    %v1142 = vsel %vm1114, %v1080, %v1128
    %v1143 = vsel %vm1115, %v1085, %v1129
    %v1144 = vsel %vm1116, %v1088, %v1130
    %v1145 = vsel %vm1117, %v1093, %v1131
    %v1146 = vsel %vm1118, %v1096, %v1132
    %v1147 = vsel %vm1119, %v1101, %v1133
    %v1148 = vsel %vm1120, %v1104, %v1134
    %v1149 = vpack.c.bf16 %v1136, %v1135
    %v1150 = vpack.c.bf16 %v1138, %v1137
    %v1151 = vpack.c.bf16 %v1140, %v1139
    %v1152 = vpack.c.bf16 %v1142, %v1141
    %v1153 = vpack.c.bf16 %v1144, %v1143
    %v1154 = vpack.c.bf16 %v1146, %v1145
    %v1155 = vpack.c.bf16 %v1148, %v1147
    %v1156 = vld [vmem:[%s3] sm:$0xf]
    %v1157 = vld [vmem:[%s3 + $0x4] sm:$0xf]
    %v1158 = vld [vmem:[%s3 + $0x8] sm:$0xf]
    %v1159 = vld [vmem:[%s3 + $0xc] sm:$0xf]
    %v1160 = vld [vmem:[%s3 + $0x10] sm:$0xf]
    %v1161 = vld [vmem:[%s3 + $0x14] sm:$0xf]
    %v1162 = vld [vmem:[%s3 + $0x18] sm:$0xf]
    %v1163 = vld [vmem:[%s3 + $0x1c] sm:$0xf]
    %v1164 = vld [vmem:[%s4] sm:$0x1]
    %v1166 = vlaneseq
    %v1167 = vshrl.u32 %v1166, 7
    %v1168 = vsub.s32 0, %v1167
    %v1169 = vrot.slane %v1164, %v1168
    %v1179 = vunpack.c.l.b16 %v1156
    %v1180 = vunpack.c.l.b16 %v1157
    %v1181 = vunpack.c.l.b16 %v1158
    %v1182 = vunpack.c.l.b16 %v1159
    %v1183 = vunpack.c.l.b16 %v1160
    %v1184 = vunpack.c.l.b16 %v1161
    %v1185 = vunpack.c.l.b16 %v1162
    %v1186 = vunpack.c.l.b16 %v1163
    %v1187 = vpack.c.b16 %v1180, %v1179
    %v1188 = vpack.c.b16 %v1182, %v1181
    %v1189 = vpack.c.b16 %v1184, %v1183
    %v1190 = vpack.c.b16 %v1186, %v1185
    %vm1195 = vcmask 523264
    %v1197 = vsel %vm1195, %v1149, 0
    %v1200 = vsel %vm1195, %v1150, 0
    %v1203 = vsel %vm1195, %v1151, 0
    %v1206 = vsel %vm1195, %v1152, 0
    %v1209 = vsel %vm1195, %v1153, 0
    %v1212 = vsel %vm1195, %v1154, 0
    %v1215 = vsel %vm1195, %v1155, 0
    %1217 = vmatprep.subr.bf16.mxu0 0
    %1218 = vmatpush1.bf16.msra.mxu0 0
    %1219 = vmatprep.subr.bf16.mxu0 0
    %1220 = vmatpush1.bf16.msra.mxu0 0
    %1221 = vmatprep.subr.bf16.mxu0 0
    %1222 = vmatpush1.bf16.msra.mxu0 0
    %1223 = vmatprep.subr.bf16.mxu0 0
    %1224 = vmatpush1.bf16.msra.mxu0 0
    %1225 = vmatprep.subr.bf16.mxu0 0
    %1226 = vmatpush1.bf16.msra.mxu0 %v1190
    %1227 = vmatprep.subr.bf16.mxu0 0
    %1228 = vmatpush1.bf16.msra.mxu0 %v1189
    %1229 = vmatprep.subr.bf16.mxu0 0
    %1230 = vmatpush1.bf16.msra.mxu0 %v1188
    %1231 = vmatprep.subr.bf16.mxu0 0
    %1232 = vmatpush1.bf16.msra.mxu0 %v1187
    %1233 = vmatprep.subr.bf16.mxu0 0
    %1234 = vmatpush2.bf16.msra.mxu0 0
    %1235 = vmatprep.subr.bf16.mxu0 0
    %1236 = vmatpush2.bf16.msra.mxu0 0
    %1237 = vmatprep.subr.bf16.mxu0 0
    %1238 = vmatpush2.bf16.msra.mxu0 0
    %1239 = vmatprep.subr.bf16.mxu0 0
    %1240 = vmatpush2.bf16.msra.mxu0 0
    %1241 = vmatprep.subr.bf16.mxu0 0
    %1242 = vmatpush2.bf16.msra.mxu0 0
    %1243 = vmatprep.subr.bf16.mxu0 0
    %1244 = vmatpush2.bf16.msra.mxu0 0
    %1245 = vmatprep.subr.bf16.mxu0 0
    %1246 = vmatpush2.bf16.msra.mxu0 0
    %1247 = vmatprep.subr.bf16.mxu0 0
    %1248 = vmatpush2.bf16.msra.mxu0 0
    %1249 = vmatprep.mubr.bf16.mxu0 0
    %1250 = vmatmul.mubr.bf16.gmra.mxu0 %v1197
    %v1251 = vpop.f32.mrf.mxu0
    %v1252 = vadd.f32 %v1169, %v1251
    %v1253 = vpop.f32.mrf.mxu0
    %v1254 = vpop.f32.mrf.mxu0
    %v1255 = vadd.f32 %v1169, %v1254
    %v1256 = vpop.f32.mrf.mxu0
    %1257 = vmatprep.mubr.bf16.mxu0 0
    %1258 = vmatmul.mubr.bf16.gmra.mxu0 %v1200
    %v1259 = vpop.f32.mrf.mxu0
    %v1260 = vadd.f32 %v1169, %v1259
    %v1261 = vpop.f32.mrf.mxu0
    %v1262 = vpop.f32.mrf.mxu0
    %v1263 = vadd.f32 %v1169, %v1262
    %v1264 = vpop.f32.mrf.mxu0
    %1265 = vmatprep.mubr.bf16.mxu0 0
    %1266 = vmatmul.mubr.bf16.gmra.mxu0 %v1203
    %v1267 = vpop.f32.mrf.mxu0
    %v1268 = vadd.f32 %v1169, %v1267
    %v1269 = vpop.f32.mrf.mxu0
    %v1270 = vpop.f32.mrf.mxu0
    %v1271 = vadd.f32 %v1169, %v1270
    %v1272 = vpop.f32.mrf.mxu0
    %1273 = vmatprep.mubr.bf16.mxu0 0
    %1274 = vmatmul.mubr.bf16.gmra.mxu0 %v1206
    %v1275 = vpop.f32.mrf.mxu0
    %v1276 = vadd.f32 %v1169, %v1275
    %v1277 = vpop.f32.mrf.mxu0
    %v1278 = vpop.f32.mrf.mxu0
    %v1279 = vadd.f32 %v1169, %v1278
    %v1280 = vpop.f32.mrf.mxu0
    %1281 = vmatprep.mubr.bf16.mxu0 0
    %1282 = vmatmul.mubr.bf16.gmra.mxu0 %v1209
    %v1283 = vpop.f32.mrf.mxu0
    %v1284 = vadd.f32 %v1169, %v1283
    %v1285 = vpop.f32.mrf.mxu0
    %v1286 = vpop.f32.mrf.mxu0
    %v1287 = vadd.f32 %v1169, %v1286
    %v1288 = vpop.f32.mrf.mxu0
    %1289 = vmatprep.mubr.bf16.mxu0 0
    %1290 = vmatmul.mubr.bf16.gmra.mxu0 %v1212
    %v1291 = vpop.f32.mrf.mxu0
    %v1292 = vadd.f32 %v1169, %v1291
    %v1293 = vpop.f32.mrf.mxu0
    %v1294 = vpop.f32.mrf.mxu0
    %v1295 = vadd.f32 %v1169, %v1294
    %v1296 = vpop.f32.mrf.mxu0
    %1297 = vmatprep.mubr.bf16.mxu0 0
    %1298 = vmatmul.mubr.bf16.gmra.mxu0 %v1215
    %v1299 = vpop.f32.mrf.mxu0
    %v1300 = vadd.f32 %v1169, %v1299
    %v1301 = vpop.f32.mrf.mxu0
    %v1302 = vpop.f32.mrf.mxu0
    %v1303 = vadd.f32 %v1169, %v1302
    %v1304 = vpop.f32.mrf.mxu0
    %1305 = vdwg.mxu0
    %vm1306 = vcmp.gt.f32.partialorder %v1252, 0.0
    %vm1307 = vcmp.gt.f32.partialorder %v1255, 0.0
    %vm1308 = vcmp.gt.f32.partialorder %v1260, 0.0
    %vm1309 = vcmp.gt.f32.partialorder %v1263, 0.0
    %vm1310 = vcmp.gt.f32.partialorder %v1268, 0.0
    %vm1311 = vcmp.gt.f32.partialorder %v1271, 0.0
    %vm1312 = vcmp.gt.f32.partialorder %v1276, 0.0
    %vm1313 = vcmp.gt.f32.partialorder %v1279, 0.0
    %vm1314 = vcmp.gt.f32.partialorder %v1284, 0.0
    %vm1315 = vcmp.gt.f32.partialorder %v1287, 0.0
    %vm1316 = vcmp.gt.f32.partialorder %v1292, 0.0
    %vm1317 = vcmp.gt.f32.partialorder %v1295, 0.0
    %vm1318 = vcmp.gt.f32.partialorder %v1300, 0.0
    %vm1319 = vcmp.gt.f32.partialorder %v1303, 0.0
    %v1320 = vmul.f32 %v1252, 0.2
    %v1321 = vmul.f32 %v1255, 0.2
    %v1322 = vmul.f32 %v1260, 0.2
    %v1323 = vmul.f32 %v1263, 0.2
    %v1324 = vmul.f32 %v1268, 0.2
    %v1325 = vmul.f32 %v1271, 0.2
    %v1326 = vmul.f32 %v1276, 0.2
    %v1327 = vmul.f32 %v1279, 0.2
    %v1328 = vmul.f32 %v1284, 0.2
    %v1329 = vmul.f32 %v1287, 0.2
    %v1330 = vmul.f32 %v1292, 0.2
    %v1331 = vmul.f32 %v1295, 0.2
    %v1332 = vmul.f32 %v1300, 0.2
    %v1333 = vmul.f32 %v1303, 0.2
    %v1334 = vsel %vm1306, %v1252, %v1320
    %v1335 = vsel %vm1307, %v1255, %v1321
    %v1336 = vsel %vm1308, %v1260, %v1322
    %v1337 = vsel %vm1309, %v1263, %v1323
    %v1338 = vsel %vm1310, %v1268, %v1324
    %v1339 = vsel %vm1311, %v1271, %v1325
    %v1340 = vsel %vm1312, %v1276, %v1326
    %v1341 = vsel %vm1313, %v1279, %v1327
    %v1342 = vsel %vm1314, %v1284, %v1328
    %v1343 = vsel %vm1315, %v1287, %v1329
    %v1344 = vsel %vm1316, %v1292, %v1330
    %v1345 = vsel %vm1317, %v1295, %v1331
    %v1346 = vsel %vm1318, %v1300, %v1332
    %v1347 = vsel %vm1319, %v1303, %v1333
    %v1348 = vld [vmem:[%s5] sm:$0x1]
    %v1349 = vpack.c.bf16 %v1335, %v1334
    %v1350 = vpack.c.bf16 %v1337, %v1336
    %v1351 = vpack.c.bf16 %v1339, %v1338
    %v1352 = vpack.c.bf16 %v1341, %v1340
    %v1353 = vpack.c.bf16 %v1343, %v1342
    %v1354 = vpack.c.bf16 %v1345, %v1344
    %v1355 = vpack.c.bf16 %v1347, %v1346
    %s1356 = sld [smem:[#allocation2]]
    %v1357 = vstv %s1356
    %v1359 = vsel %vm1195, %v1348, 0
    %v1362 = vsel %vm1195, %v1349, 0
    %v1365 = vsel %vm1195, %v1350, 0
    %v1368 = vsel %vm1195, %v1351, 0
    %v1371 = vsel %vm1195, %v1352, 0
    %v1374 = vsel %vm1195, %v1353, 0
    %v1377 = vsel %vm1195, %v1354, 0
    %v1380 = vsel %vm1195, %v1355, 0
    %1382 = vmatprep.subr.bf16.mxu0 0
    %1383 = vmatpush1.bf16.xpose.msra.mxu0 0
    %1384 = vmatprep.subr.bf16.mxu0 0
    %1385 = vmatpush1.bf16.xpose.msra.mxu0 %v1380
    %1386 = vmatprep.subr.bf16.mxu0 0
    %1387 = vmatpush1.bf16.xpose.msra.mxu0 %v1377
    %1388 = vmatprep.subr.bf16.mxu0 0
    %1389 = vmatpush1.bf16.xpose.msra.mxu0 %v1374
    %1390 = vmatprep.subr.bf16.mxu0 0
    %1391 = vmatpush1.bf16.xpose.msra.mxu0 %v1371
    %1392 = vmatprep.subr.bf16.mxu0 0
    %1393 = vmatpush1.bf16.xpose.msra.mxu0 %v1368
    %1394 = vmatprep.subr.bf16.mxu0 0
    %1395 = vmatpush1.bf16.xpose.msra.mxu0 %v1365
    %1396 = vmatprep.subr.bf16.mxu0 0
    %1397 = vmatpush1.bf16.xpose.msra.mxu0 %v1362
    %1398 = vmatprep.subr.bf16.mxu0 0
    %1399 = vmatpush2.bf16.xpose.msra.mxu0 0
    %1400 = vmatprep.subr.bf16.mxu0 0
    %1401 = vmatpush2.bf16.xpose.msra.mxu0 0
    %1402 = vmatprep.subr.bf16.mxu0 0
    %1403 = vmatpush2.bf16.xpose.msra.mxu0 0
    %1404 = vmatprep.subr.bf16.mxu0 0
    %1405 = vmatpush2.bf16.xpose.msra.mxu0 0
    %1406 = vmatprep.subr.bf16.mxu0 0
    %1407 = vmatpush2.bf16.xpose.msra.mxu0 0
    %1408 = vmatprep.subr.bf16.mxu0 0
    %1409 = vmatpush2.bf16.xpose.msra.mxu0 0
    %1410 = vmatprep.subr.bf16.mxu0 0
    %1411 = vmatpush2.bf16.xpose.msra.mxu0 0
    %1412 = vmatprep.subr.bf16.mxu0 0
    %1413 = vmatpush2.bf16.xpose.msra.mxu0 0
    %1414 = vmatprep.mubr.bf16.mxu0 0
    %1415 = vmatmul.mubr.bf16.gmra.mxu0 %v1359
    %v1416 = vpop.f32.mrf.mxu0
    %v1417 = vadd.f32 %v1357, %v1416
    %v1418 = vpop.f32.mrf.mxu0
    %v1419 = vpop.f32.mrf.mxu0
    %v1420 = vpop.f32.mrf.mxu0
    %1421 = vdwg.mxu0
    %v1422 = vxor.u32 %v1417, 2147483648
    %v1423 = vmul.f32 %v1422, 1.442695
    %v1424 = vpow.pop %v1423
    %v1425 = vadd.f32 %v1424, 1.0
    %v1426 = vrcp.pop %v1425
    %v1427 = vmul.f32 1.0, %v1426
    %vm1428 = vcmask 909312
    %1429 = vst.msk [vmem:[#allocation3] sm:$0x1] %vm1428, %v1427
    // Predicated region
    $region30: #{tpu_custom_call.1} parent=1 // pred_check
      _
    $region31: #{tpu_custom_call.1} parent=1 // pred_check_branch
      %1431 = sbr.rel (0) target = $region33
    $region32: #{tpu_custom_call.1} parent=1 // pred_region
      %s1433 = ssub.s32 16, 16
      %1434 = vsyncadd [#allocation4], %s1433
      %s1436 = sshll.u32 [#allocation3], 4
      %s1437 = int_to_ptr.vmem [resolvable:$true] %s1436
      %1439 = dma.vmem_to_hbm [thread:$0]  %s1437, 16, %s7, [#allocation4]
    $region33: #{tpu_custom_call.1} parent=1 // pred_fallthru
      _
    // Predicated region
    $region34: #{tpu_custom_call.1} parent=1 // pred_check
      _
    $region35: #{tpu_custom_call.1} parent=1 // pred_check_branch
      %1441 = sbr.rel (0) target = $region37
    $region36: #{tpu_custom_call.1} parent=1 // pred_region
      %1442 = dma.done [#allocation4], 16
    $region37: #{tpu_custom_call.1} parent=1 // pred_fallthru
      _
    %1443 = vsyncpa [#allocation4], 1

</llo_original>
